<compile_context>
chip_gen: v6e
topology: v6e:2x2x1
jax: 0.10.0
libtpu: 0.0.40
codegen_flags: <defaults>
</compile_context>

<pallas_src>
import functools

import jax
import jax.numpy as jnp
from jax.experimental import pallas as pl
from jax.experimental.pallas import tpu as pltpu

LANE = 128


def _round_up(x, m):
    return ((x + m - 1) // m) * m


def _mlp_kernel(f_ref, c_ref,
                w1f, w1c, w2, w3, w4, w5, w6,
                bpk, b6,
                o_ref):
    """Fused forward of the whole nn.Sequential for one batch tile.

    f_ref : (TB, x_dim)       VMEM, f32
    c_ref : (TB, latent_dim)  VMEM, f32
    w*    : bf16 weights (in, out), resident in VMEM (constant block index)
    bpk   : (5, H) f32 — biases of the five hidden layers, one per row
    b6    : (1, x_dim) f32 — final-layer bias
    o_ref : (TB, x_dim)       VMEM, f32 (unpadded, lane-masked store;
                              the HBM writeback stays contiguous rows)
    """
    f = f_ref[...].astype(jnp.bfloat16)
    c = c_ref[...].astype(jnp.bfloat16)

    # Layer 1: fused "torch.cat" via split matmul; f32 accumulation + epilogue.
    h = (jnp.dot(f, w1f[...], preferred_element_type=jnp.float32)
         + jnp.dot(c, w1c[...], preferred_element_type=jnp.float32)
         + bpk[0:1, :])
    h = jnp.maximum(h, 0.0)

    # Layers 2-5: Linear + ReLU.
    for i, w in enumerate((w2, w3, w4, w5)):
        h = jnp.dot(h.astype(jnp.bfloat16), w[...],
                    preferred_element_type=jnp.float32) + bpk[i + 1:i + 2, :]
        h = jnp.maximum(h, 0.0)

    # Final layer: no ReLU, narrow (x_dim-wide) output.
    y = jnp.dot(h.astype(jnp.bfloat16), w6[...],
                preferred_element_type=jnp.float32) + b6[...]
    o_ref[...] = y.astype(o_ref.dtype)


def init_params(key, x_dim, latent_dim, hidden_dim):
    """Synthetic params matching the PyTorch module's shapes.

    Weights stored as (in_features, out_features) so the kernel does h @ W + b
    (equivalent to PyTorch's x @ W.T + b).
    """
    input_dim = x_dim + latent_dim
    output_dim = x_dim
    dims = [input_dim, hidden_dim, hidden_dim, hidden_dim, hidden_dim,
            hidden_dim, output_dim]
    params = []
    for i in range(6):
        fan_in, fan_out = dims[i], dims[i + 1]
        key, kw, kb = jax.random.split(key, 3)
        bound = 1.0 / jnp.sqrt(jnp.float32(fan_in))
        w = jax.random.uniform(kw, (fan_in, fan_out), jnp.float32, -bound, bound)
        b = jax.random.uniform(kb, (1, fan_out), jnp.float32, -bound, bound)
        params.append((w, b))
    return params


def prepare_params(params, x_dim):
    """Split W1 (fuses the concat), cast weights to bf16, pack hidden biases."""
    w1, b1 = params[0]
    w1f = w1[:x_dim, :].astype(jnp.bfloat16)
    w1c = w1[x_dim:, :].astype(jnp.bfloat16)
    weights = [w1f, w1c]
    hidden_biases = [b1.reshape(1, -1)]
    for w, b in params[1:5]:
        weights.append(w.astype(jnp.bfloat16))
        hidden_biases.append(b.reshape(1, -1))
    w6, b6 = params[5]
    weights.append(w6.astype(jnp.bfloat16))                    # (H, x_dim), unpadded
    bpk = jnp.concatenate(hidden_biases, axis=0).astype(jnp.float32)   # (5, H)
    b6 = b6.reshape(1, -1).astype(jnp.float32)                 # (1, x_dim)
    return tuple(weights) + (bpk, b6)


def _choose_tile(B, tile_b):
    """Batch tile: big (amortise ~0.35us step cost), multiple of 16, >= 16."""
    tb = min(tile_b, _round_up(B, 16))
    tb = max(16, (tb // 16) * 16)
    # If everything fits in one tile, split in two only when the per-tile work
    # clearly exceeds the grid-step cost (so v7x's two TCs both get real work).
    if B <= tb and tb >= 1024:
        tb = max(16, _round_up((B + 1) // 2, 16))
    return tb


@functools.partial(jax.jit, static_argnames=("x_dim", "tile_b"))
def context_to_rhs(t, f_data, context, prep_params, x_dim, tile_b=1024):
    """Pallas implementation of ContextToRHS.forward.

    `t` is accepted for signature parity with the PyTorch module but unused
    (exactly as in the reference forward).
    """
    del t
    B, fx = f_data.shape
    _, lat = context.shape
    (w1f, w1c, w2, w3, w4, w5, w6, bpk, b6) = prep_params
    hid = w1f.shape[1]
    out_dim = w6.shape[1]          # == x_dim

    tb = _choose_tile(B, tile_b)
    grid = (pl.cdiv(B, tb),)       # ragged last block handled by Pallas masking

    def batch_spec(cols):
        return pl.BlockSpec((tb, cols), lambda i: (i, 0))

    def full_spec(arr):
        # Constant block index -> weights DMA'd once, resident across the grid.
        return pl.BlockSpec(arr.shape, lambda i: (0, 0))

    in_specs = [batch_spec(fx), batch_spec(lat)]
    in_specs += [full_spec(a) for a in prep_params]
    out_spec = pl.BlockSpec((tb, out_dim), lambda i: (i, 0))

    # Right-size the scoped VMEM request (v7x: only 64 MiB physical per TC):
    # double-buffered lane-padded in/out tiles + weights + live f32
    # activations, ~2x headroom, clamped to [16 MiB, 48 MiB].
    io_tile = tb * LANE * 4 * 3
    weight_bytes = sum(int(a.size) * a.dtype.itemsize for a in prep_params)
    act_bytes = tb * max(hid, LANE) * 4 * 4
    vmem_limit = int(min(48 << 20,
                         max(16 << 20,
                             2 * (2 * io_tile + 2 * weight_bytes + act_bytes))))

    return pl.pallas_call(
        _mlp_kernel,
        out_shape=jax.ShapeDtypeStruct((B, out_dim), f_data.dtype),
        grid_spec=pltpu.PrefetchScalarGridSpec(
            num_scalar_prefetch=0,
            grid=grid,
            in_specs=in_specs,
            out_specs=out_spec,
        ),
        compiler_params=pltpu.CompilerParams(
            dimension_semantics=("parallel",),
            vmem_limit_bytes=vmem_limit,
        ),
    )(f_data, context, *prep_params)


def reference_forward(t, f_data, context, prep_params, x_dim):
    """Pure-JAX reference mirroring the kernel math (bf16 weights, f32 accum)."""
    del t, x_dim
    (w1f, w1c, w2, w3, w4, w5, w6, bpk, b6) = prep_params
    f = f_data.astype(jnp.bfloat16)
    c = context.astype(jnp.bfloat16)
    h = (jnp.dot(f, w1f, preferred_element_type=jnp.float32)
         + jnp.dot(c, w1c, preferred_element_type=jnp.float32) + bpk[0:1, :])
    h = jnp.maximum(h, 0.0)
    for i, w in enumerate((w2, w3, w4, w5)):
        h = jnp.maximum(
            jnp.dot(h.astype(jnp.bfloat16), w,
                    preferred_element_type=jnp.float32) + bpk[i + 1:i + 2, :],
            0.0)
    y = jnp.dot(h.astype(jnp.bfloat16), w6,
                preferred_element_type=jnp.float32) + b6
    return y.astype(f_data.dtype)


if __name__ == "__main__":
    # Small, module-consistent shapes:
    #   batch B=16, x_dim=8, latent_dim=8 -> input_dim=16, hidden_dim=128
    B, X_DIM, LATENT_DIM, HIDDEN_DIM = 16, 8, 8, 128

    key = jax.random.PRNGKey(0)
    k_par, k_f, k_c = jax.random.split(key, 3)

    params = init_params(k_par, X_DIM, LATENT_DIM, HIDDEN_DIM)
    prep = prepare_params(params, X_DIM)

    f_data = jax.random.normal(k_f, (B, X_DIM), jnp.float32)
    context = jax.random.normal(k_c, (B, LATENT_DIM), jnp.float32)
    t = jnp.zeros((), jnp.float32)  # unused, kept for signature parity

    out = jax.block_until_ready(context_to_rhs(t, f_data, context, prep, X_DIM))
    ref = reference_forward(t, f_data, context, prep, X_DIM)
    assert out.shape == (B, X_DIM), out.shape
    assert jnp.allclose(out, ref, atol=1e-3, rtol=1e-3), "mismatch vs JAX reference"

    # Ragged-batch path: B not a multiple of the tile — exercises the pl.cdiv
    # grid with Pallas edge-block masking (no wrapper pad/slice round-trips).
    B2 = 40
    k_f2, k_c2 = jax.random.split(jax.random.PRNGKey(1))
    f2 = jax.random.normal(k_f2, (B2, X_DIM), jnp.float32)
    c2 = jax.random.normal(k_c2, (B2, LATENT_DIM), jnp.float32)
    out2 = jax.block_until_ready(
        context_to_rhs(t, f2, c2, prep, X_DIM, tile_b=16))
    ref2 = reference_forward(t, f2, c2, prep, X_DIM)
    assert out2.shape == (B2, X_DIM), out2.shape
    assert jnp.allclose(out2, ref2, atol=1e-3, rtol=1e-3), "ragged-batch mismatch"

    print("KERNEL_OK")
</pallas_src>

<mosaic_0001>
module attributes {stable_mosaic.version = 11 : i64} {
  func.func @_mlp_kernel(%arg0: i32, %arg1: memref<16x8xf32, #tpu.memory_space<vmem>>, %arg2: memref<16x8xf32, #tpu.memory_space<vmem>>, %arg3: memref<8x128xbf16, #tpu.memory_space<vmem>>, %arg4: memref<8x128xbf16, #tpu.memory_space<vmem>>, %arg5: memref<128x128xbf16, #tpu.memory_space<vmem>>, %arg6: memref<128x128xbf16, #tpu.memory_space<vmem>>, %arg7: memref<128x128xbf16, #tpu.memory_space<vmem>>, %arg8: memref<128x128xbf16, #tpu.memory_space<vmem>>, %arg9: memref<128x8xbf16, #tpu.memory_space<vmem>>, %arg10: memref<5x128xf32, #tpu.memory_space<vmem>>, %arg11: memref<1x8xf32, #tpu.memory_space<vmem>>, %arg12: memref<16x8xf32, #tpu.memory_space<vmem>>) attributes {dimension_semantics = [#tpu.dimension_semantics<parallel>], iteration_bounds = array<i64: 1>, scalar_prefetch = 0 : i64, scratch_operands = 0 : i64, tpu.core_type = #tpu.core_type<tc>, window_params = [{transform_indices = @transform_0, window_bounds = array<i64: 16, 8>}, {transform_indices = @transform_1, window_bounds = array<i64: 16, 8>}, {pipeline_mode = #tpu.pipeline_mode<synchronous>, transform_indices = @transform_2, window_bounds = array<i64: 8, 128>}, {pipeline_mode = #tpu.pipeline_mode<synchronous>, transform_indices = @transform_3, window_bounds = array<i64: 8, 128>}, {pipeline_mode = #tpu.pipeline_mode<synchronous>, transform_indices = @transform_4, window_bounds = array<i64: 128, 128>}, {pipeline_mode = #tpu.pipeline_mode<synchronous>, transform_indices = @transform_5, window_bounds = array<i64: 128, 128>}, {pipeline_mode = #tpu.pipeline_mode<synchronous>, transform_indices = @transform_6, window_bounds = array<i64: 128, 128>}, {pipeline_mode = #tpu.pipeline_mode<synchronous>, transform_indices = @transform_7, window_bounds = array<i64: 128, 128>}, {pipeline_mode = #tpu.pipeline_mode<synchronous>, transform_indices = @transform_8, window_bounds = array<i64: 128, 8>}, {pipeline_mode = #tpu.pipeline_mode<synchronous>, transform_indices = @transform_9, window_bounds = array<i64: 5, 128>}, {pipeline_mode = #tpu.pipeline_mode<synchronous>, transform_indices = @transform_10, window_bounds = array<i64: 1, 8>}, {transform_indices = @transform_11, window_bounds = array<i64: 16, 8>}]} {
    %c0 = arith.constant 0 : index
    %c0_0 = arith.constant 0 : index
    %0 = vector.load %arg1[%c0, %c0_0] : memref<16x8xf32, #tpu.memory_space<vmem>>, vector<16x8xf32>
    %1 = arith.truncf %0 : vector<16x8xf32> to vector<16x8xbf16>
    %c0_1 = arith.constant 0 : index
    %c0_2 = arith.constant 0 : index
    %2 = vector.load %arg2[%c0_1, %c0_2] : memref<16x8xf32, #tpu.memory_space<vmem>>, vector<16x8xf32>
    %3 = arith.truncf %2 : vector<16x8xf32> to vector<16x8xbf16>
    %c0_3 = arith.constant 0 : index
    %c0_4 = arith.constant 0 : index
    %4 = vector.load %arg3[%c0_3, %c0_4] : memref<8x128xbf16, #tpu.memory_space<vmem>>, vector<8x128xbf16>
    %cst = arith.constant dense<0.000000e+00> : vector<16x128xf32>
    %5 = tpu.matmul %1, %4, %cst {dimension_numbers = #tpu.dot_dimension_numbers<[1], [0], [0], [1], [0, 0, 1, 1], [], []>} : vector<16x8xbf16>, vector<8x128xbf16>, vector<16x128xf32> -> vector<16x128xf32>
    %c0_5 = arith.constant 0 : index
    %c0_6 = arith.constant 0 : index
    %6 = vector.load %arg4[%c0_5, %c0_6] : memref<8x128xbf16, #tpu.memory_space<vmem>>, vector<8x128xbf16>
    %cst_7 = arith.constant dense<0.000000e+00> : vector<16x128xf32>
    %7 = tpu.matmul %3, %6, %cst_7 {dimension_numbers = #tpu.dot_dimension_numbers<[1], [0], [0], [1], [0, 0, 1, 1], [], []>} : vector<16x8xbf16>, vector<8x128xbf16>, vector<16x128xf32> -> vector<16x128xf32>
    %8 = arith.addf %5, %7 : vector<16x128xf32>
    %c0_8 = arith.constant 0 : index
    %c0_9 = arith.constant 0 : index
    %9 = vector.load %arg10[%c0_8, %c0_9] : memref<5x128xf32, #tpu.memory_space<vmem>>, vector<1x128xf32>
    %10 = vector.broadcast %9 : vector<1x128xf32> to vector<16x128xf32>
    %11 = arith.addf %8, %10 : vector<16x128xf32>
    %cst_10 = arith.constant 0.000000e+00 : f32
    %12 = vector.broadcast %cst_10 : f32 to vector<16x128xf32>
    %13 = arith.maximumf %11, %12 : vector<16x128xf32>
    %14 = arith.truncf %13 : vector<16x128xf32> to vector<16x128xbf16>
    %c0_11 = arith.constant 0 : index
    %c0_12 = arith.constant 0 : index
    %15 = vector.load %arg5[%c0_11, %c0_12] : memref<128x128xbf16, #tpu.memory_space<vmem>>, vector<128x128xbf16>
    %cst_13 = arith.constant dense<0.000000e+00> : vector<16x128xf32>
    %16 = tpu.matmul %14, %15, %cst_13 {dimension_numbers = #tpu.dot_dimension_numbers<[1], [0], [0], [1], [0, 0, 1, 1], [], []>} : vector<16x128xbf16>, vector<128x128xbf16>, vector<16x128xf32> -> vector<16x128xf32>
    %c1 = arith.constant 1 : index
    %c0_14 = arith.constant 0 : index
    %17 = vector.load %arg10[%c1, %c0_14] : memref<5x128xf32, #tpu.memory_space<vmem>>, vector<1x128xf32>
    %18 = vector.broadcast %17 : vector<1x128xf32> to vector<16x128xf32>
    %19 = arith.addf %16, %18 : vector<16x128xf32>
    %cst_15 = arith.constant 0.000000e+00 : f32
    %20 = vector.broadcast %cst_15 : f32 to vector<16x128xf32>
    %21 = arith.maximumf %19, %20 : vector<16x128xf32>
    %22 = arith.truncf %21 : vector<16x128xf32> to vector<16x128xbf16>
    %c0_16 = arith.constant 0 : index
    %c0_17 = arith.constant 0 : index
    %23 = vector.load %arg6[%c0_16, %c0_17] : memref<128x128xbf16, #tpu.memory_space<vmem>>, vector<128x128xbf16>
    %cst_18 = arith.constant dense<0.000000e+00> : vector<16x128xf32>
    %24 = tpu.matmul %22, %23, %cst_18 {dimension_numbers = #tpu.dot_dimension_numbers<[1], [0], [0], [1], [0, 0, 1, 1], [], []>} : vector<16x128xbf16>, vector<128x128xbf16>, vector<16x128xf32> -> vector<16x128xf32>
    %c2 = arith.constant 2 : index
    %c0_19 = arith.constant 0 : index
    %25 = vector.load %arg10[%c2, %c0_19] : memref<5x128xf32, #tpu.memory_space<vmem>>, vector<1x128xf32>
    %26 = vector.broadcast %25 : vector<1x128xf32> to vector<16x128xf32>
    %27 = arith.addf %24, %26 : vector<16x128xf32>
    %cst_20 = arith.constant 0.000000e+00 : f32
    %28 = vector.broadcast %cst_20 : f32 to vector<16x128xf32>
    %29 = arith.maximumf %27, %28 : vector<16x128xf32>
    %30 = arith.truncf %29 : vector<16x128xf32> to vector<16x128xbf16>
    %c0_21 = arith.constant 0 : index
    %c0_22 = arith.constant 0 : index
    %31 = vector.load %arg7[%c0_21, %c0_22] : memref<128x128xbf16, #tpu.memory_space<vmem>>, vector<128x128xbf16>
    %cst_23 = arith.constant dense<0.000000e+00> : vector<16x128xf32>
    %32 = tpu.matmul %30, %31, %cst_23 {dimension_numbers = #tpu.dot_dimension_numbers<[1], [0], [0], [1], [0, 0, 1, 1], [], []>} : vector<16x128xbf16>, vector<128x128xbf16>, vector<16x128xf32> -> vector<16x128xf32>
    %c3 = arith.constant 3 : index
    %c0_24 = arith.constant 0 : index
    %33 = vector.load %arg10[%c3, %c0_24] : memref<5x128xf32, #tpu.memory_space<vmem>>, vector<1x128xf32>
    %34 = vector.broadcast %33 : vector<1x128xf32> to vector<16x128xf32>
    %35 = arith.addf %32, %34 : vector<16x128xf32>
    %cst_25 = arith.constant 0.000000e+00 : f32
    %36 = vector.broadcast %cst_25 : f32 to vector<16x128xf32>
    %37 = arith.maximumf %35, %36 : vector<16x128xf32>
    %38 = arith.truncf %37 : vector<16x128xf32> to vector<16x128xbf16>
    %c0_26 = arith.constant 0 : index
    %c0_27 = arith.constant 0 : index
    %39 = vector.load %arg8[%c0_26, %c0_27] : memref<128x128xbf16, #tpu.memory_space<vmem>>, vector<128x128xbf16>
    %cst_28 = arith.constant dense<0.000000e+00> : vector<16x128xf32>
    %40 = tpu.matmul %38, %39, %cst_28 {dimension_numbers = #tpu.dot_dimension_numbers<[1], [0], [0], [1], [0, 0, 1, 1], [], []>} : vector<16x128xbf16>, vector<128x128xbf16>, vector<16x128xf32> -> vector<16x128xf32>
    %c4 = arith.constant 4 : index
    %c0_29 = arith.constant 0 : index
    %41 = vector.load %arg10[%c4, %c0_29] : memref<5x128xf32, #tpu.memory_space<vmem>>, vector<1x128xf32>
    %42 = vector.broadcast %41 : vector<1x128xf32> to vector<16x128xf32>
    %43 = arith.addf %40, %42 : vector<16x128xf32>
    %cst_30 = arith.constant 0.000000e+00 : f32
    %44 = vector.broadcast %cst_30 : f32 to vector<16x128xf32>
    %45 = arith.maximumf %43, %44 : vector<16x128xf32>
    %46 = arith.truncf %45 : vector<16x128xf32> to vector<16x128xbf16>
    %c0_31 = arith.constant 0 : index
    %c0_32 = arith.constant 0 : index
    %47 = vector.load %arg9[%c0_31, %c0_32] : memref<128x8xbf16, #tpu.memory_space<vmem>>, vector<128x8xbf16>
    %cst_33 = arith.constant dense<0.000000e+00> : vector<16x8xf32>
    %48 = tpu.matmul %46, %47, %cst_33 {dimension_numbers = #tpu.dot_dimension_numbers<[1], [0], [0], [1], [0, 0, 1, 1], [], []>} : vector<16x128xbf16>, vector<128x8xbf16>, vector<16x8xf32> -> vector<16x8xf32>
    %c0_34 = arith.constant 0 : index
    %c0_35 = arith.constant 0 : index
    %49 = vector.load %arg11[%c0_34, %c0_35] : memref<1x8xf32, #tpu.memory_space<vmem>>, vector<1x8xf32>
    %50 = vector.broadcast %49 : vector<1x8xf32> to vector<16x8xf32>
    %51 = arith.addf %48, %50 : vector<16x8xf32>
    %c0_36 = arith.constant 0 : index
    %c0_37 = arith.constant 0 : index
    %52 = vector.load %arg12[%c0_36, %c0_37] : memref<16x8xf32, #tpu.memory_space<vmem>>, vector<16x8xf32>
    tpu.vector_store %arg12[%c0_36, %c0_37], %51 {strides = array<i32>} : memref<16x8xf32, #tpu.memory_space<vmem>>, vector<16x8xf32>,
    return
  }
  func.func @transform_0(%arg0: i32) -> (i32, i32) {
    %c0_i32 = arith.constant 0 : i32
    %c0_i32_0 = arith.constant 0 : i32
    return %arg0, %c0_i32 : i32, i32
  }
  func.func @transform_1(%arg0: i32) -> (i32, i32) {
    %c0_i32 = arith.constant 0 : i32
    %c0_i32_0 = arith.constant 0 : i32
    return %arg0, %c0_i32 : i32, i32
  }
  func.func @transform_2(%arg0: i32) -> (i32, i32) {
    %c0_i32 = arith.constant 0 : i32
    %c0_i32_0 = arith.constant 0 : i32
    %c0_i32_1 = arith.constant 0 : i32
    return %c0_i32, %c0_i32_0 : i32, i32
  }
  func.func @transform_3(%arg0: i32) -> (i32, i32) {
    %c0_i32 = arith.constant 0 : i32
    %c0_i32_0 = arith.constant 0 : i32
    %c0_i32_1 = arith.constant 0 : i32
    return %c0_i32, %c0_i32_0 : i32, i32
  }
  func.func @transform_4(%arg0: i32) -> (i32, i32) {
    %c0_i32 = arith.constant 0 : i32
    %c0_i32_0 = arith.constant 0 : i32
    %c0_i32_1 = arith.constant 0 : i32
    return %c0_i32, %c0_i32_0 : i32, i32
  }
  func.func @transform_5(%arg0: i32) -> (i32, i32) {
    %c0_i32 = arith.constant 0 : i32
    %c0_i32_0 = arith.constant 0 : i32
    %c0_i32_1 = arith.constant 0 : i32
    return %c0_i32, %c0_i32_0 : i32, i32
  }
  func.func @transform_6(%arg0: i32) -> (i32, i32) {
    %c0_i32 = arith.constant 0 : i32
    %c0_i32_0 = arith.constant 0 : i32
    %c0_i32_1 = arith.constant 0 : i32
    return %c0_i32, %c0_i32_0 : i32, i32
  }
  func.func @transform_7(%arg0: i32) -> (i32, i32) {
    %c0_i32 = arith.constant 0 : i32
    %c0_i32_0 = arith.constant 0 : i32
    %c0_i32_1 = arith.constant 0 : i32
    return %c0_i32, %c0_i32_0 : i32, i32
  }
  func.func @transform_8(%arg0: i32) -> (i32, i32) {
    %c0_i32 = arith.constant 0 : i32
    %c0_i32_0 = arith.constant 0 : i32
    %c0_i32_1 = arith.constant 0 : i32
    return %c0_i32, %c0_i32_0 : i32, i32
  }
  func.func @transform_9(%arg0: i32) -> (i32, i32) {
    %c0_i32 = arith.constant 0 : i32
    %c0_i32_0 = arith.constant 0 : i32
    %c0_i32_1 = arith.constant 0 : i32
    return %c0_i32, %c0_i32_0 : i32, i32
  }
  func.func @transform_10(%arg0: i32) -> (i32, i32) {
    %c0_i32 = arith.constant 0 : i32
    %c0_i32_0 = arith.constant 0 : i32
    %c0_i32_1 = arith.constant 0 : i32
    return %c0_i32, %c0_i32_0 : i32, i32
  }
  func.func @transform_11(%arg0: i32) -> (i32, i32) {
    %c0_i32 = arith.constant 0 : i32
    %c0_i32_0 = arith.constant 0 : i32
    return %arg0, %c0_i32 : i32, i32
  }
}

</mosaic_0001>

<llo_original>
// kernel: context_to_rhs.1
$region0: #{context_to_rhs.1}
  #allocation0 [shape = 'u32[]', space=smem, size = 0x4, offset = 0x4, fixed_abs, tag = 'smem constant byte address 0x4 - core index']
  #allocation1 [shape = 'u32[144,128]{1,0:T(1,128)}', space=vmem, size = 0x12000, scoped, tag = 'internal scratch']
  %s0 = inlined_call_operand.vmem [shape: f32[16,8], index: 0, kind: input, shape index: {}]
  %s1 = inlined_call_operand.vmem [shape: f32[16,8], index: 1, kind: input, shape index: {}]
  %s2 = inlined_call_operand.hbm [shape: bf16[8,128], index: 2, kind: input, shape index: {}]
  %s3 = inlined_call_operand.hbm [shape: bf16[8,128], index: 3, kind: input, shape index: {}]
  %s4 = inlined_call_operand.vmem [shape: bf16[128,128], index: 4, kind: input, shape index: {}]
  %s5 = inlined_call_operand.hbm [shape: bf16[128,128], index: 5, kind: input, shape index: {}]
  %s6 = inlined_call_operand.hbm [shape: bf16[128,128], index: 6, kind: input, shape index: {}]
  %s7 = inlined_call_operand.vmem [shape: bf16[128,128], index: 7, kind: input, shape index: {}]
  %s8 = inlined_call_operand.vmem [shape: bf16[128,8], index: 8, kind: input, shape index: {}]
  %s9 = inlined_call_operand.hbm [shape: f32[5,128], index: 9, kind: input, shape index: {}]
  %s10 = inlined_call_operand.vmem [shape: f32[1,8], index: 10, kind: input, shape index: {}]
  %s11 = inlined_call_operand.vmem [shape: f32[16,8], index: 11, kind: output, shape index: {}]
  %s12 = sld [smem:[#allocation0]]
  $region74: #{context_to_rhs.1} parent=0
    _
  %s14 = ssub.s32 1, %s12
  %s15 = scalar_select 0, %s14, %s12
  $region1: #{context_to_rhs.1} parent=0
    #allocation2 [shape = 'u8[2048]{0}', space=vmem, size = 0x800, scoped, tag = 'input window, operand 2, single buffered']
    #allocation3 [shape = 's32[1]{0}', space=sflag, size = 0x4, scoped, tag = 'scoped memory for context_to_rhs.1']
    #allocation4 [shape = 'u8[2048]{0}', space=vmem, size = 0x800, scoped, tag = 'input window, operand 3, single buffered']
    #allocation5 [shape = 's32[1]{0}', space=sflag, size = 0x4, scoped, tag = 'scoped memory for context_to_rhs.1']
    #allocation6 [shape = 'u8[32768]{0}', space=vmem, size = 0x8000, scoped, tag = 'input window, operand 5, single buffered']
    #allocation7 [shape = 'u8[32768]{0}', space=vmem, size = 0x8000, scoped, tag = 'input window, operand 6, single buffered']
    #allocation8 [shape = 's32[1]{0}', space=sflag, size = 0x4, scoped, tag = 'scoped memory for context_to_rhs.1']
    #allocation9 [shape = 'u8[4096]{0}', space=vmem, size = 0x1000, scoped, tag = 'input window, operand 9, single buffered']
    %16 = vsyncpa [#allocation3], 0
    %17 = vsyncpa [#allocation5], 0
    %18 = vsyncpa [#allocation8], 0
    // Predicated region
    $region2: #{context_to_rhs.1} parent=1 // pred_check
      _
    $region3: #{context_to_rhs.1} parent=1 // pred_check_branch
      %20 = sbr.rel (0) target = $region5
    $region4: #{context_to_rhs.1} parent=1 // pred_region
      _
    $region5: #{context_to_rhs.1} parent=1 // pred_fallthru
      _
    // Predicated region
    $region6: #{context_to_rhs.1} parent=1 // pred_check
      _
    $region7: #{context_to_rhs.1} parent=1 // pred_check_branch
      %22 = sbr.rel (0) target = $region9
    $region8: #{context_to_rhs.1} parent=1 // pred_region
      _
    $region9: #{context_to_rhs.1} parent=1 // pred_fallthru
      _
    // Predicated region
    $region10: #{context_to_rhs.1} parent=1 // pred_check
      _
    $region11: #{context_to_rhs.1} parent=1 // pred_check_branch
      %24 = sbr.rel (0) target = $region13
    $region12: #{context_to_rhs.1} parent=1 // pred_region
      %s26 = ssub.s32 64, 64
      %27 = vsyncadd [#allocation3], %s26
      %s29 = sshll.u32 [#allocation2], 4
      %s30 = int_to_ptr.vmem [resolvable:$true] %s29
      %32 = dma.hbm_to_vmem [thread:$0]  %s2, 64, %s30, [#allocation3]
    $region13: #{context_to_rhs.1} parent=1 // pred_fallthru
      _
    // Predicated region
    $region14: #{context_to_rhs.1} parent=1 // pred_check
      _
    $region15: #{context_to_rhs.1} parent=1 // pred_check_branch
      %34 = sbr.rel (0) target = $region17
    $region16: #{context_to_rhs.1} parent=1 // pred_region
      %s36 = ssub.s32 64, 64
      %37 = vsyncadd [#allocation5], %s36
      %s39 = sshll.u32 [#allocation4], 4
      %s40 = int_to_ptr.vmem [resolvable:$true] %s39
      %42 = dma.hbm_to_vmem [thread:$0]  %s3, 64, %s40, [#allocation5]
    $region17: #{context_to_rhs.1} parent=1 // pred_fallthru
      _
    // Predicated region
    $region18: #{context_to_rhs.1} parent=1 // pred_check
      _
    $region19: #{context_to_rhs.1} parent=1 // pred_check_branch
      %44 = sbr.rel (0) target = $region21
    $region20: #{context_to_rhs.1} parent=1 // pred_region
      _
    $region21: #{context_to_rhs.1} parent=1 // pred_fallthru
      _
    // Predicated region
    $region22: #{context_to_rhs.1} parent=1 // pred_check
      _
    $region23: #{context_to_rhs.1} parent=1 // pred_check_branch
      %46 = sbr.rel (0) target = $region25
    $region24: #{context_to_rhs.1} parent=1 // pred_region
      %s48 = ssub.s32 1024, 1024
      %49 = vsyncadd [#allocation5], %s48
      %s50 = sshll.u32 [#allocation6], 4
      %s51 = int_to_ptr.vmem [resolvable:$true] %s50
      %56 = dma.hbm_to_vmem [thread:$0]  %s5, 1024, %s51, [#allocation5], 64, 64, 4
    $region25: #{context_to_rhs.1} parent=1 // pred_fallthru
      _
    // Predicated region
    $region26: #{context_to_rhs.1} parent=1 // pred_check
      _
    $region27: #{context_to_rhs.1} parent=1 // pred_check_branch
      %58 = sbr.rel (0) target = $region29
    $region28: #{context_to_rhs.1} parent=1 // pred_region
      %s60 = ssub.s32 1024, 1024
      %61 = vsyncadd [#allocation8], %s60
      %s62 = sshll.u32 [#allocation7], 4
      %s63 = int_to_ptr.vmem [resolvable:$true] %s62
      %68 = dma.hbm_to_vmem [thread:$0]  %s6, 1024, %s63, [#allocation8], 64, 64, 4
    $region29: #{context_to_rhs.1} parent=1 // pred_fallthru
      _
    // Predicated region
    $region30: #{context_to_rhs.1} parent=1 // pred_check
      _
    $region31: #{context_to_rhs.1} parent=1 // pred_check_branch
      %70 = sbr.rel (0) target = $region33
    $region32: #{context_to_rhs.1} parent=1 // pred_region
      _
    $region33: #{context_to_rhs.1} parent=1 // pred_fallthru
      _
    // Predicated region
    $region34: #{context_to_rhs.1} parent=1 // pred_check
      _
    $region35: #{context_to_rhs.1} parent=1 // pred_check_branch
      %72 = sbr.rel (0) target = $region37
    $region36: #{context_to_rhs.1} parent=1 // pred_region
      _
    $region37: #{context_to_rhs.1} parent=1 // pred_fallthru
      _
    // Predicated region
    $region38: #{context_to_rhs.1} parent=1 // pred_check
      _
    $region39: #{context_to_rhs.1} parent=1 // pred_check_branch
      %74 = sbr.rel (0) target = $region41
    $region40: #{context_to_rhs.1} parent=1 // pred_region
      %s76 = ssub.s32 128, 128
      %77 = vsyncadd [#allocation8], %s76
      %s79 = sshll.u32 [#allocation9], 4
      %s80 = int_to_ptr.vmem [resolvable:$true] %s79
      %82 = dma.hbm_to_vmem [thread:$0]  %s9, 128, %s80, [#allocation8]
    $region41: #{context_to_rhs.1} parent=1 // pred_fallthru
      _
    // Predicated region
    $region42: #{context_to_rhs.1} parent=1 // pred_check
      _
    $region43: #{context_to_rhs.1} parent=1 // pred_check_branch
      %84 = sbr.rel (0) target = $region45
    $region44: #{context_to_rhs.1} parent=1 // pred_region
      _
    $region45: #{context_to_rhs.1} parent=1 // pred_fallthru
      _
    // Predicated region
    $region46: #{context_to_rhs.1} parent=1 // pred_check
      _
    $region47: #{context_to_rhs.1} parent=1 // pred_check_branch
      %86 = sbr.rel (0) target = $region49
    $region48: #{context_to_rhs.1} parent=1 // pred_region
      %87 = dma.done [#allocation3], 64
    $region49: #{context_to_rhs.1} parent=1 // pred_fallthru
      _
    // Predicated region
    $region50: #{context_to_rhs.1} parent=1 // pred_check
      _
    $region51: #{context_to_rhs.1} parent=1 // pred_check_branch
      %89 = sbr.rel (0) target = $region53
    $region52: #{context_to_rhs.1} parent=1 // pred_region
      %90 = dma.done [#allocation5], 64
    $region53: #{context_to_rhs.1} parent=1 // pred_fallthru
      _
    // Predicated region
    $region54: #{context_to_rhs.1} parent=1 // pred_check
      _
    $region55: #{context_to_rhs.1} parent=1 // pred_check_branch
      %92 = sbr.rel (0) target = $region57
    $region56: #{context_to_rhs.1} parent=1 // pred_region
      %93 = dma.done [#allocation5], 1024
    $region57: #{context_to_rhs.1} parent=1 // pred_fallthru
      _
    // Predicated region
    $region58: #{context_to_rhs.1} parent=1 // pred_check
      _
    $region59: #{context_to_rhs.1} parent=1 // pred_check_branch
      %95 = sbr.rel (0) target = $region61
    $region60: #{context_to_rhs.1} parent=1 // pred_region
      %96 = dma.done [#allocation8], 1024
    $region61: #{context_to_rhs.1} parent=1 // pred_fallthru
      _
    // Predicated region
    $region62: #{context_to_rhs.1} parent=1 // pred_check
      _
    $region63: #{context_to_rhs.1} parent=1 // pred_check_branch
      %98 = sbr.rel (0) target = $region65
    $region64: #{context_to_rhs.1} parent=1 // pred_region
      %99 = dma.done [#allocation8], 128
    $region65: #{context_to_rhs.1} parent=1 // pred_fallthru
      _
    %v101 = vld [vmem:[%s0] sm:$0xff]
    %v102 = vld [vmem:[%s0 + $0x8] sm:$0xff]
    %v103 = vpack.c.bf16 %v102, %v101
    %v104 = vld [vmem:[%s1] sm:$0xff]
    %v105 = vld [vmem:[%s1 + $0x8] sm:$0xff]
    %v106 = vpack.c.bf16 %v105, %v104
    %v107 = vld [vmem:[#allocation2] sm:$0xf]
    %v108 = vld [vmem:[#allocation4] sm:$0xf]
    %vm109 = vcmask 64512
    %v111 = vsel %vm109, %v106, 0
    %vm113 = vcmask 1043456
    %v115 = vsel %vm113, %v108, 0
    %117 = vmatprep.subr.bf16.mxu0 0
    %118 = vmatpush1.bf16.msra.mxu0 0
    %119 = vmatprep.subr.bf16.mxu0 0
    %120 = vmatpush1.bf16.msra.mxu0 0
    %121 = vmatprep.subr.bf16.mxu0 0
    %122 = vmatpush1.bf16.msra.mxu0 0
    %123 = vmatprep.subr.bf16.mxu0 0
    %124 = vmatpush1.bf16.msra.mxu0 0
    %125 = vmatprep.subr.bf16.mxu0 0
    %126 = vmatpush1.bf16.msra.mxu0 0
    %127 = vmatprep.subr.bf16.mxu0 0
    %128 = vmatpush1.bf16.msra.mxu0 0
    %129 = vmatprep.subr.bf16.mxu0 0
    %130 = vmatpush1.bf16.msra.mxu0 0
    %131 = vmatprep.subr.bf16.mxu0 0
    %132 = vmatpush1.bf16.msra.mxu0 %v115
    %133 = vmatprep.subr.bf16.mxu0 0
    %134 = vmatpush2.bf16.msra.mxu0 0
    %135 = vmatprep.subr.bf16.mxu0 0
    %136 = vmatpush2.bf16.msra.mxu0 0
    %137 = vmatprep.subr.bf16.mxu0 0
    %138 = vmatpush2.bf16.msra.mxu0 0
    %139 = vmatprep.subr.bf16.mxu0 0
    %140 = vmatpush2.bf16.msra.mxu0 0
    %141 = vmatprep.subr.bf16.mxu0 0
    %142 = vmatpush2.bf16.msra.mxu0 0
    %143 = vmatprep.subr.bf16.mxu0 0
    %144 = vmatpush2.bf16.msra.mxu0 0
    %145 = vmatprep.subr.bf16.mxu0 0
    %146 = vmatpush2.bf16.msra.mxu0 0
    %147 = vmatprep.subr.bf16.mxu0 0
    %148 = vmatpush2.bf16.msra.mxu0 0
    %149 = vmatprep.mubr.bf16.mxu0 0
    %150 = vmatmul.mubr.bf16.gmra.mxu0 %v111
    %v151 = vpop.f32.mrf.mxu0
    %v152 = vadd.f32 0.0, %v151
    %v153 = vpop.f32.mrf.mxu0
    %v154 = vpop.f32.mrf.mxu0
    %v155 = vadd.f32 0.0, %v154
    %v156 = vpop.f32.mrf.mxu0
    %157 = vdwg.mxu0
    %v159 = vsel %vm109, %v103, 0
    %v162 = vsel %vm113, %v107, 0
    %164 = vmatprep.subr.bf16.mxu0 0
    %165 = vmatpush1.bf16.msra.mxu0 0
    %166 = vmatprep.subr.bf16.mxu0 0
    %167 = vmatpush1.bf16.msra.mxu0 0
    %168 = vmatprep.subr.bf16.mxu0 0
    %169 = vmatpush1.bf16.msra.mxu0 0
    %170 = vmatprep.subr.bf16.mxu0 0
    %171 = vmatpush1.bf16.msra.mxu0 0
    %172 = vmatprep.subr.bf16.mxu0 0
    %173 = vmatpush1.bf16.msra.mxu0 0
    %174 = vmatprep.subr.bf16.mxu0 0
    %175 = vmatpush1.bf16.msra.mxu0 0
    %176 = vmatprep.subr.bf16.mxu0 0
    %177 = vmatpush1.bf16.msra.mxu0 0
    %178 = vmatprep.subr.bf16.mxu0 0
    %179 = vmatpush1.bf16.msra.mxu0 %v162
    %180 = vmatprep.subr.bf16.mxu0 0
    %181 = vmatpush2.bf16.msra.mxu0 0
    %182 = vmatprep.subr.bf16.mxu0 0
    %183 = vmatpush2.bf16.msra.mxu0 0
    %184 = vmatprep.subr.bf16.mxu0 0
    %185 = vmatpush2.bf16.msra.mxu0 0
    %186 = vmatprep.subr.bf16.mxu0 0
    %187 = vmatpush2.bf16.msra.mxu0 0
    %188 = vmatprep.subr.bf16.mxu0 0
    %189 = vmatpush2.bf16.msra.mxu0 0
    %190 = vmatprep.subr.bf16.mxu0 0
    %191 = vmatpush2.bf16.msra.mxu0 0
    %192 = vmatprep.subr.bf16.mxu0 0
    %193 = vmatpush2.bf16.msra.mxu0 0
    %194 = vmatprep.subr.bf16.mxu0 0
    %195 = vmatpush2.bf16.msra.mxu0 0
    %196 = vmatprep.mubr.bf16.mxu0 0
    %197 = vmatmul.mubr.bf16.gmra.mxu0 %v159
    %v198 = vpop.f32.mrf.mxu0
    %v199 = vadd.f32 %v152, %v198
    %v200 = vpop.f32.mrf.mxu0
    %v201 = vpop.f32.mrf.mxu0
    %v202 = vadd.f32 %v155, %v201
    %v203 = vpop.f32.mrf.mxu0
    %204 = vdwg.mxu0
    %v205 = vld [vmem:[#allocation9] sm:$0x1]
    %v206 = vlaneseq
    %v207 = vshrl.u32 %v206, 7
    %v208 = vsub.s32 0, %v207
    %v209 = vrot.slane %v205, %v208
    %v210 = vadd.f32 %v199, %v209
    %v211 = vadd.f32 %v202, %v209
    %v212 = vmax.f32 %v210, 0.0
    %v213 = vmax.f32 %v211, 0.0
    %v214 = vpack.c.bf16 %v213, %v212
    %v215 = vld [vmem:[%s4] sm:$0xf]
    %v216 = vld [vmem:[%s4 + $0x4] sm:$0xf]
    %v217 = vld [vmem:[%s4 + $0x8] sm:$0xf]
    %v218 = vld [vmem:[%s4 + $0xc] sm:$0xf]
    %v219 = vld [vmem:[%s4 + $0x10] sm:$0xf]
    %v220 = vld [vmem:[%s4 + $0x14] sm:$0xf]
    %v221 = vld [vmem:[%s4 + $0x18] sm:$0xf]
    %v222 = vld [vmem:[%s4 + $0x1c] sm:$0xf]
    %v223 = vld [vmem:[%s4 + $0x20] sm:$0xf]
    %v224 = vld [vmem:[%s4 + $0x24] sm:$0xf]
    %v225 = vld [vmem:[%s4 + $0x28] sm:$0xf]
    %v226 = vld [vmem:[%s4 + $0x2c] sm:$0xf]
    %v227 = vld [vmem:[%s4 + $0x30] sm:$0xf]
    %v228 = vld [vmem:[%s4 + $0x34] sm:$0xf]
    %v229 = vld [vmem:[%s4 + $0x38] sm:$0xf]
    %v230 = vld [vmem:[%s4 + $0x3c] sm:$0xf]
    %v231 = vld [vmem:[#allocation9 + $0x1] sm:$0x1]
    %v232 = vlaneseq
    %v233 = vshrl.u32 %v232, 7
    %v234 = vsub.s32 0, %v233
    %v235 = vrot.slane %v231, %v234
    %v252 = vunpack.c.l.b16 %v215
    %v253 = vunpack.c.l.b16 %v216
    %v254 = vunpack.c.l.b16 %v217
    %v255 = vunpack.c.l.b16 %v218
    %v256 = vunpack.c.l.b16 %v219
    %v257 = vunpack.c.l.b16 %v220
    %v258 = vunpack.c.l.b16 %v221
    %v259 = vunpack.c.l.b16 %v222
    %v260 = vunpack.c.l.b16 %v223
    %v261 = vunpack.c.l.b16 %v224
    %v262 = vunpack.c.l.b16 %v225
    %v263 = vunpack.c.l.b16 %v226
    %v264 = vunpack.c.l.b16 %v227
    %v265 = vunpack.c.l.b16 %v228
    %v266 = vunpack.c.l.b16 %v229
    %v267 = vunpack.c.l.b16 %v230
    %v268 = vpack.c.b16 %v253, %v252
    %v269 = vpack.c.b16 %v255, %v254
    %v270 = vpack.c.b16 %v257, %v256
    %v271 = vpack.c.b16 %v259, %v258
    %v272 = vpack.c.b16 %v261, %v260
    %v273 = vpack.c.b16 %v263, %v262
    %v274 = vpack.c.b16 %v265, %v264
    %v275 = vpack.c.b16 %v267, %v266
    %284 = vmatprep.subr.bf16.mxu0 0
    %285 = vmatpush1.bf16.msra.mxu0 %v275
    %286 = vmatprep.subr.bf16.mxu0 0
    %287 = vmatpush1.bf16.msra.mxu0 %v274
    %288 = vmatprep.subr.bf16.mxu0 0
    %289 = vmatpush1.bf16.msra.mxu0 %v273
    %290 = vmatprep.subr.bf16.mxu0 0
    %291 = vmatpush1.bf16.msra.mxu0 %v272
    %292 = vmatprep.subr.bf16.mxu0 0
    %293 = vmatpush1.bf16.msra.mxu0 %v271
    %294 = vmatprep.subr.bf16.mxu0 0
    %295 = vmatpush1.bf16.msra.mxu0 %v270
    %296 = vmatprep.subr.bf16.mxu0 0
    %297 = vmatpush1.bf16.msra.mxu0 %v269
    %298 = vmatprep.subr.bf16.mxu0 0
    %299 = vmatpush1.bf16.msra.mxu0 %v268
    %300 = vmatprep.subr.bf16.mxu0 0
    %301 = vmatpush2.bf16.msra.mxu0 0
    %302 = vmatprep.subr.bf16.mxu0 0
    %303 = vmatpush2.bf16.msra.mxu0 0
    %304 = vmatprep.subr.bf16.mxu0 0
    %305 = vmatpush2.bf16.msra.mxu0 0
    %306 = vmatprep.subr.bf16.mxu0 0
    %307 = vmatpush2.bf16.msra.mxu0 0
    %308 = vmatprep.subr.bf16.mxu0 0
    %309 = vmatpush2.bf16.msra.mxu0 0
    %310 = vmatprep.subr.bf16.mxu0 0
    %311 = vmatpush2.bf16.msra.mxu0 0
    %312 = vmatprep.subr.bf16.mxu0 0
    %313 = vmatpush2.bf16.msra.mxu0 0
    %314 = vmatprep.subr.bf16.mxu0 0
    %315 = vmatpush2.bf16.msra.mxu0 0
    %316 = vmatprep.mubr.bf16.mxu0 0
    %317 = vmatmul.mubr.bf16.gmra.mxu0 %v214
    %v318 = vpop.f32.mrf.mxu0
    %v319 = vadd.f32 %v235, %v318
    %v320 = vpop.f32.mrf.mxu0
    %v321 = vpop.f32.mrf.mxu0
    %v322 = vadd.f32 %v235, %v321
    %v323 = vpop.f32.mrf.mxu0
    %324 = vdwg.mxu0
    %v325 = vmax.f32 %v319, 0.0
    %v326 = vmax.f32 %v322, 0.0
    %v327 = vpack.c.bf16 %v326, %v325
    %v328 = vld [vmem:[#allocation6] sm:$0xf]
    %v329 = vld [vmem:[#allocation6 + $0x4] sm:$0xf]
    %v330 = vld [vmem:[#allocation6 + $0x8] sm:$0xf]
    %v331 = vld [vmem:[#allocation6 + $0xc] sm:$0xf]
    %v332 = vld [vmem:[#allocation6 + $0x10] sm:$0xf]
    %v333 = vld [vmem:[#allocation6 + $0x14] sm:$0xf]
    %v334 = vld [vmem:[#allocation6 + $0x18] sm:$0xf]
    %v335 = vld [vmem:[#allocation6 + $0x1c] sm:$0xf]
    %v336 = vld [vmem:[#allocation6 + $0x20] sm:$0xf]
    %v337 = vld [vmem:[#allocation6 + $0x24] sm:$0xf]
    %v338 = vld [vmem:[#allocation6 + $0x28] sm:$0xf]
    %v339 = vld [vmem:[#allocation6 + $0x2c] sm:$0xf]
    %v340 = vld [vmem:[#allocation6 + $0x30] sm:$0xf]
    %v341 = vld [vmem:[#allocation6 + $0x34] sm:$0xf]
    %v342 = vld [vmem:[#allocation6 + $0x38] sm:$0xf]
    %v343 = vld [vmem:[#allocation6 + $0x3c] sm:$0xf]
    %v344 = vld [vmem:[#allocation9 + $0x2] sm:$0x1]
    %v345 = vlaneseq
    %v346 = vshrl.u32 %v345, 7
    %v347 = vsub.s32 0, %v346
    %v348 = vrot.slane %v344, %v347
    %v365 = vunpack.c.l.b16 %v328
    %v366 = vunpack.c.l.b16 %v329
    %v367 = vunpack.c.l.b16 %v330
    %v368 = vunpack.c.l.b16 %v331
    %v369 = vunpack.c.l.b16 %v332
    %v370 = vunpack.c.l.b16 %v333
    %v371 = vunpack.c.l.b16 %v334
    %v372 = vunpack.c.l.b16 %v335
    %v373 = vunpack.c.l.b16 %v336
    %v374 = vunpack.c.l.b16 %v337
    %v375 = vunpack.c.l.b16 %v338
    %v376 = vunpack.c.l.b16 %v339
    %v377 = vunpack.c.l.b16 %v340
    %v378 = vunpack.c.l.b16 %v341
    %v379 = vunpack.c.l.b16 %v342
    %v380 = vunpack.c.l.b16 %v343
    %v381 = vpack.c.b16 %v366, %v365
    %v382 = vpack.c.b16 %v368, %v367
    %v383 = vpack.c.b16 %v370, %v369
    %v384 = vpack.c.b16 %v372, %v371
    %v385 = vpack.c.b16 %v374, %v373
    %v386 = vpack.c.b16 %v376, %v375
    %v387 = vpack.c.b16 %v378, %v377
    %v388 = vpack.c.b16 %v380, %v379
    %397 = vmatprep.subr.bf16.mxu0 0
    %398 = vmatpush1.bf16.msra.mxu0 %v388
    %399 = vmatprep.subr.bf16.mxu0 0
    %400 = vmatpush1.bf16.msra.mxu0 %v387
    %401 = vmatprep.subr.bf16.mxu0 0
    %402 = vmatpush1.bf16.msra.mxu0 %v386
    %403 = vmatprep.subr.bf16.mxu0 0
    %404 = vmatpush1.bf16.msra.mxu0 %v385
    %405 = vmatprep.subr.bf16.mxu0 0
    %406 = vmatpush1.bf16.msra.mxu0 %v384
    %407 = vmatprep.subr.bf16.mxu0 0
    %408 = vmatpush1.bf16.msra.mxu0 %v383
    %409 = vmatprep.subr.bf16.mxu0 0
    %410 = vmatpush1.bf16.msra.mxu0 %v382
    %411 = vmatprep.subr.bf16.mxu0 0
    %412 = vmatpush1.bf16.msra.mxu0 %v381
    %413 = vmatprep.subr.bf16.mxu0 0
    %414 = vmatpush2.bf16.msra.mxu0 0
    %415 = vmatprep.subr.bf16.mxu0 0
    %416 = vmatpush2.bf16.msra.mxu0 0
    %417 = vmatprep.subr.bf16.mxu0 0
    %418 = vmatpush2.bf16.msra.mxu0 0
    %419 = vmatprep.subr.bf16.mxu0 0
    %420 = vmatpush2.bf16.msra.mxu0 0
    %421 = vmatprep.subr.bf16.mxu0 0
    %422 = vmatpush2.bf16.msra.mxu0 0
    %423 = vmatprep.subr.bf16.mxu0 0
    %424 = vmatpush2.bf16.msra.mxu0 0
    %425 = vmatprep.subr.bf16.mxu0 0
    %426 = vmatpush2.bf16.msra.mxu0 0
    %427 = vmatprep.subr.bf16.mxu0 0
    %428 = vmatpush2.bf16.msra.mxu0 0
    %429 = vmatprep.mubr.bf16.mxu0 0
    %430 = vmatmul.mubr.bf16.gmra.mxu0 %v327
    %v431 = vpop.f32.mrf.mxu0
    %v432 = vadd.f32 %v348, %v431
    %v433 = vpop.f32.mrf.mxu0
    %v434 = vpop.f32.mrf.mxu0
    %v435 = vadd.f32 %v348, %v434
    %v436 = vpop.f32.mrf.mxu0
    %437 = vdwg.mxu0
    %v438 = vmax.f32 %v432, 0.0
    %v439 = vmax.f32 %v435, 0.0
    %v440 = vpack.c.bf16 %v439, %v438
    %v441 = vld [vmem:[#allocation7] sm:$0xf]
    %v442 = vld [vmem:[#allocation7 + $0x4] sm:$0xf]
    %v443 = vld [vmem:[#allocation7 + $0x8] sm:$0xf]
    %v444 = vld [vmem:[#allocation7 + $0xc] sm:$0xf]
    %v445 = vld [vmem:[#allocation7 + $0x10] sm:$0xf]
    %v446 = vld [vmem:[#allocation7 + $0x14] sm:$0xf]
    %v447 = vld [vmem:[#allocation7 + $0x18] sm:$0xf]
    %v448 = vld [vmem:[#allocation7 + $0x1c] sm:$0xf]
    %v449 = vld [vmem:[#allocation7 + $0x20] sm:$0xf]
    %v450 = vld [vmem:[#allocation7 + $0x24] sm:$0xf]
    %v451 = vld [vmem:[#allocation7 + $0x28] sm:$0xf]
    %v452 = vld [vmem:[#allocation7 + $0x2c] sm:$0xf]
    %v453 = vld [vmem:[#allocation7 + $0x30] sm:$0xf]
    %v454 = vld [vmem:[#allocation7 + $0x34] sm:$0xf]
    %v455 = vld [vmem:[#allocation7 + $0x38] sm:$0xf]
    %v456 = vld [vmem:[#allocation7 + $0x3c] sm:$0xf]
    %v457 = vld [vmem:[#allocation9 + $0x3] sm:$0x1]
    %v458 = vlaneseq
    %v459 = vshrl.u32 %v458, 7
    %v460 = vsub.s32 0, %v459
    %v461 = vrot.slane %v457, %v460
    %v478 = vunpack.c.l.b16 %v441
    %v479 = vunpack.c.l.b16 %v442
    %v480 = vunpack.c.l.b16 %v443
    %v481 = vunpack.c.l.b16 %v444
    %v482 = vunpack.c.l.b16 %v445
    %v483 = vunpack.c.l.b16 %v446
    %v484 = vunpack.c.l.b16 %v447
    %v485 = vunpack.c.l.b16 %v448
    %v486 = vunpack.c.l.b16 %v449
    %v487 = vunpack.c.l.b16 %v450
    %v488 = vunpack.c.l.b16 %v451
    %v489 = vunpack.c.l.b16 %v452
    %v490 = vunpack.c.l.b16 %v453
    %v491 = vunpack.c.l.b16 %v454
    %v492 = vunpack.c.l.b16 %v455
    %v493 = vunpack.c.l.b16 %v456
    %v494 = vpack.c.b16 %v479, %v478
    %v495 = vpack.c.b16 %v481, %v480
    %v496 = vpack.c.b16 %v483, %v482
    %v497 = vpack.c.b16 %v485, %v484
    %v498 = vpack.c.b16 %v487, %v486
    %v499 = vpack.c.b16 %v489, %v488
    %v500 = vpack.c.b16 %v491, %v490
    %v501 = vpack.c.b16 %v493, %v492
    %510 = vmatprep.subr.bf16.mxu0 0
    %511 = vmatpush1.bf16.msra.mxu0 %v501
    %512 = vmatprep.subr.bf16.mxu0 0
    %513 = vmatpush1.bf16.msra.mxu0 %v500
    %514 = vmatprep.subr.bf16.mxu0 0
    %515 = vmatpush1.bf16.msra.mxu0 %v499
    %516 = vmatprep.subr.bf16.mxu0 0
    %517 = vmatpush1.bf16.msra.mxu0 %v498
    %518 = vmatprep.subr.bf16.mxu0 0
    %519 = vmatpush1.bf16.msra.mxu0 %v497
    %520 = vmatprep.subr.bf16.mxu0 0
    %521 = vmatpush1.bf16.msra.mxu0 %v496
    %522 = vmatprep.subr.bf16.mxu0 0
    %523 = vmatpush1.bf16.msra.mxu0 %v495
    %524 = vmatprep.subr.bf16.mxu0 0
    %525 = vmatpush1.bf16.msra.mxu0 %v494
    %526 = vmatprep.subr.bf16.mxu0 0
    %527 = vmatpush2.bf16.msra.mxu0 0
    %528 = vmatprep.subr.bf16.mxu0 0
    %529 = vmatpush2.bf16.msra.mxu0 0
    %530 = vmatprep.subr.bf16.mxu0 0
    %531 = vmatpush2.bf16.msra.mxu0 0
    %532 = vmatprep.subr.bf16.mxu0 0
    %533 = vmatpush2.bf16.msra.mxu0 0
    %534 = vmatprep.subr.bf16.mxu0 0
    %535 = vmatpush2.bf16.msra.mxu0 0
    %536 = vmatprep.subr.bf16.mxu0 0
    %537 = vmatpush2.bf16.msra.mxu0 0
    %538 = vmatprep.subr.bf16.mxu0 0
    %539 = vmatpush2.bf16.msra.mxu0 0
    %540 = vmatprep.subr.bf16.mxu0 0
    %541 = vmatpush2.bf16.msra.mxu0 0
    %542 = vmatprep.mubr.bf16.mxu0 0
    %543 = vmatmul.mubr.bf16.gmra.mxu0 %v440
    %v544 = vpop.f32.mrf.mxu0
    %v545 = vadd.f32 %v461, %v544
    %v546 = vpop.f32.mrf.mxu0
    %v547 = vpop.f32.mrf.mxu0
    %v548 = vadd.f32 %v461, %v547
    %v549 = vpop.f32.mrf.mxu0
    %550 = vdwg.mxu0
    %v551 = vmax.f32 %v545, 0.0
    %v552 = vmax.f32 %v548, 0.0
    %v553 = vpack.c.bf16 %v552, %v551
    %v554 = vld [vmem:[%s7] sm:$0xf]
    %v555 = vld [vmem:[%s7 + $0x4] sm:$0xf]
    %v556 = vld [vmem:[%s7 + $0x8] sm:$0xf]
    %v557 = vld [vmem:[%s7 + $0xc] sm:$0xf]
    %v558 = vld [vmem:[%s7 + $0x10] sm:$0xf]
    %v559 = vld [vmem:[%s7 + $0x14] sm:$0xf]
    %v560 = vld [vmem:[%s7 + $0x18] sm:$0xf]
    %v561 = vld [vmem:[%s7 + $0x1c] sm:$0xf]
    %v562 = vld [vmem:[%s7 + $0x20] sm:$0xf]
    %v563 = vld [vmem:[%s7 + $0x24] sm:$0xf]
    %v564 = vld [vmem:[%s7 + $0x28] sm:$0xf]
    %v565 = vld [vmem:[%s7 + $0x2c] sm:$0xf]
    %v566 = vld [vmem:[%s7 + $0x30] sm:$0xf]
    %v567 = vld [vmem:[%s7 + $0x34] sm:$0xf]
    %v568 = vld [vmem:[%s7 + $0x38] sm:$0xf]
    %v569 = vld [vmem:[%s7 + $0x3c] sm:$0xf]
    %v570 = vld [vmem:[#allocation9 + $0x4] sm:$0x1]
    %v571 = vlaneseq
    %v572 = vshrl.u32 %v571, 7
    %v573 = vsub.s32 0, %v572
    %v574 = vrot.slane %v570, %v573
    %v591 = vunpack.c.l.b16 %v554
    %v592 = vunpack.c.l.b16 %v555
    %v593 = vunpack.c.l.b16 %v556
    %v594 = vunpack.c.l.b16 %v557
    %v595 = vunpack.c.l.b16 %v558
    %v596 = vunpack.c.l.b16 %v559
    %v597 = vunpack.c.l.b16 %v560
    %v598 = vunpack.c.l.b16 %v561
    %v599 = vunpack.c.l.b16 %v562
    %v600 = vunpack.c.l.b16 %v563
    %v601 = vunpack.c.l.b16 %v564
    %v602 = vunpack.c.l.b16 %v565
    %v603 = vunpack.c.l.b16 %v566
    %v604 = vunpack.c.l.b16 %v567
    %v605 = vunpack.c.l.b16 %v568
    %v606 = vunpack.c.l.b16 %v569
    %v607 = vpack.c.b16 %v592, %v591
    %v608 = vpack.c.b16 %v594, %v593
    %v609 = vpack.c.b16 %v596, %v595
    %v610 = vpack.c.b16 %v598, %v597
    %v611 = vpack.c.b16 %v600, %v599
    %v612 = vpack.c.b16 %v602, %v601
    %v613 = vpack.c.b16 %v604, %v603
    %v614 = vpack.c.b16 %v606, %v605
    %623 = vmatprep.subr.bf16.mxu0 0
    %624 = vmatpush1.bf16.msra.mxu0 %v614
    %625 = vmatprep.subr.bf16.mxu0 0
    %626 = vmatpush1.bf16.msra.mxu0 %v613
    %627 = vmatprep.subr.bf16.mxu0 0
    %628 = vmatpush1.bf16.msra.mxu0 %v612
    %629 = vmatprep.subr.bf16.mxu0 0
    %630 = vmatpush1.bf16.msra.mxu0 %v611
    %631 = vmatprep.subr.bf16.mxu0 0
    %632 = vmatpush1.bf16.msra.mxu0 %v610
    %633 = vmatprep.subr.bf16.mxu0 0
    %634 = vmatpush1.bf16.msra.mxu0 %v609
    %635 = vmatprep.subr.bf16.mxu0 0
    %636 = vmatpush1.bf16.msra.mxu0 %v608
    %637 = vmatprep.subr.bf16.mxu0 0
    %638 = vmatpush1.bf16.msra.mxu0 %v607
    %639 = vmatprep.subr.bf16.mxu0 0
    %640 = vmatpush2.bf16.msra.mxu0 0
    %641 = vmatprep.subr.bf16.mxu0 0
    %642 = vmatpush2.bf16.msra.mxu0 0
    %643 = vmatprep.subr.bf16.mxu0 0
    %644 = vmatpush2.bf16.msra.mxu0 0
    %645 = vmatprep.subr.bf16.mxu0 0
    %646 = vmatpush2.bf16.msra.mxu0 0
    %647 = vmatprep.subr.bf16.mxu0 0
    %648 = vmatpush2.bf16.msra.mxu0 0
    %649 = vmatprep.subr.bf16.mxu0 0
    %650 = vmatpush2.bf16.msra.mxu0 0
    %651 = vmatprep.subr.bf16.mxu0 0
    %652 = vmatpush2.bf16.msra.mxu0 0
    %653 = vmatprep.subr.bf16.mxu0 0
    %654 = vmatpush2.bf16.msra.mxu0 0
    %655 = vmatprep.mubr.bf16.mxu0 0
    %656 = vmatmul.mubr.bf16.gmra.mxu0 %v553
    %v657 = vpop.f32.mrf.mxu0
    %v658 = vadd.f32 %v574, %v657
    %v659 = vpop.f32.mrf.mxu0
    %v660 = vpop.f32.mrf.mxu0
    %v661 = vadd.f32 %v574, %v660
    %v662 = vpop.f32.mrf.mxu0
    %663 = vdwg.mxu0
    %v664 = vmax.f32 %v658, 0.0
    %v665 = vmax.f32 %v661, 0.0
    %v666 = vpack.c.bf16 %v665, %v664
    %v667 = vld [vmem:[%s8] sm:$0xf]
    %v668 = vld [vmem:[%s8 + $0x4] sm:$0xf]
    %v669 = vld [vmem:[%s8 + $0x8] sm:$0xf]
    %v670 = vld [vmem:[%s8 + $0xc] sm:$0xf]
    %v671 = vld [vmem:[%s8 + $0x10] sm:$0xf]
    %v672 = vld [vmem:[%s8 + $0x14] sm:$0xf]
    %v673 = vld [vmem:[%s8 + $0x18] sm:$0xf]
    %v674 = vld [vmem:[%s8 + $0x1c] sm:$0xf]
    %v675 = vld [vmem:[%s8 + $0x20] sm:$0xf]
    %v676 = vld [vmem:[%s8 + $0x24] sm:$0xf]
    %v677 = vld [vmem:[%s8 + $0x28] sm:$0xf]
    %v678 = vld [vmem:[%s8 + $0x2c] sm:$0xf]
    %v679 = vld [vmem:[%s8 + $0x30] sm:$0xf]
    %v680 = vld [vmem:[%s8 + $0x34] sm:$0xf]
    %v681 = vld [vmem:[%s8 + $0x38] sm:$0xf]
    %v682 = vld [vmem:[%s8 + $0x3c] sm:$0xf]
    %v683 = vld [vmem:[%s10] sm:$0x1]
    %v685 = vlaneseq
    %v686 = vshrl.u32 %v685, 7
    %v687 = vsub.s32 0, %v686
    %v688 = vrot.slane %v683, %v687
    %v706 = vunpack.c.l.b16 %v667
    %v707 = vunpack.c.l.b16 %v668
    %v708 = vunpack.c.l.b16 %v669
    %v709 = vunpack.c.l.b16 %v670
    %v710 = vunpack.c.l.b16 %v671
    %v711 = vunpack.c.l.b16 %v672
    %v712 = vunpack.c.l.b16 %v673
    %v713 = vunpack.c.l.b16 %v674
    %v714 = vunpack.c.l.b16 %v675
    %v715 = vunpack.c.l.b16 %v676
    %v716 = vunpack.c.l.b16 %v677
    %v717 = vunpack.c.l.b16 %v678
    %v718 = vunpack.c.l.b16 %v679
    %v719 = vunpack.c.l.b16 %v680
    %v720 = vunpack.c.l.b16 %v681
    %v721 = vunpack.c.l.b16 %v682
    %v722 = vpack.c.b16 %v707, %v706
    %v723 = vpack.c.b16 %v709, %v708
    %v724 = vpack.c.b16 %v711, %v710
    %v725 = vpack.c.b16 %v713, %v712
    %v726 = vpack.c.b16 %v715, %v714
    %v727 = vpack.c.b16 %v717, %v716
    %v728 = vpack.c.b16 %v719, %v718
    %v729 = vpack.c.b16 %v721, %v720
    %738 = vmatprep.subr.bf16.mxu0 0
    %739 = vmatpush1.bf16.msra.mxu0 %v729
    %740 = vmatprep.subr.bf16.mxu0 0
    %741 = vmatpush1.bf16.msra.mxu0 %v728
    %742 = vmatprep.subr.bf16.mxu0 0
    %743 = vmatpush1.bf16.msra.mxu0 %v727
    %744 = vmatprep.subr.bf16.mxu0 0
    %745 = vmatpush1.bf16.msra.mxu0 %v726
    %746 = vmatprep.subr.bf16.mxu0 0
    %747 = vmatpush1.bf16.msra.mxu0 %v725
    %748 = vmatprep.subr.bf16.mxu0 0
    %749 = vmatpush1.bf16.msra.mxu0 %v724
    %750 = vmatprep.subr.bf16.mxu0 0
    %751 = vmatpush1.bf16.msra.mxu0 %v723
    %752 = vmatprep.subr.bf16.mxu0 0
    %753 = vmatpush1.bf16.msra.mxu0 %v722
    %754 = vmatprep.subr.bf16.mxu0 0
    %755 = vmatpush2.bf16.msra.mxu0 0
    %756 = vmatprep.subr.bf16.mxu0 0
    %757 = vmatpush2.bf16.msra.mxu0 0
    %758 = vmatprep.subr.bf16.mxu0 0
    %759 = vmatpush2.bf16.msra.mxu0 0
    %760 = vmatprep.subr.bf16.mxu0 0
    %761 = vmatpush2.bf16.msra.mxu0 0
    %762 = vmatprep.subr.bf16.mxu0 0
    %763 = vmatpush2.bf16.msra.mxu0 0
    %764 = vmatprep.subr.bf16.mxu0 0
    %765 = vmatpush2.bf16.msra.mxu0 0
    %766 = vmatprep.subr.bf16.mxu0 0
    %767 = vmatpush2.bf16.msra.mxu0 0
    %768 = vmatprep.subr.bf16.mxu0 0
    %769 = vmatpush2.bf16.msra.mxu0 0
    %770 = vmatprep.mubr.bf16.mxu0 0
    %771 = vmatmul.mubr.bf16.gmra.mxu0 %v666
    %v772 = vpop.f32.mrf.mxu0
    %v773 = vadd.f32 %v688, %v772
    %v774 = vpop.f32.mrf.mxu0
    %v775 = vpop.f32.mrf.mxu0
    %v776 = vadd.f32 %v688, %v775
    %v777 = vpop.f32.mrf.mxu0
    %778 = vdwg.mxu0
    %779 = vst.msk [vmem:[%s11] sm:$0xff] %vm109, %v773
    %780 = vst.msk [vmem:[%s11 + $0x8] sm:$0xff] %vm109, %v776
    // Predicated region
    $region66: #{context_to_rhs.1} parent=1 // pred_check
      _
    $region67: #{context_to_rhs.1} parent=1 // pred_check_branch
      %782 = sbr.rel (0) target = $region69
    $region68: #{context_to_rhs.1} parent=1 // pred_region
      _
    $region69: #{context_to_rhs.1} parent=1 // pred_fallthru
      _
    // Predicated region
    $region70: #{context_to_rhs.1} parent=1 // pred_check
      _
    $region71: #{context_to_rhs.1} parent=1 // pred_check_branch
      %784 = sbr.rel (0) target = $region73
    $region72: #{context_to_rhs.1} parent=1 // pred_region
      _
    $region73: #{context_to_rhs.1} parent=1 // pred_fallthru
      _
    %785 = vsyncpa [#allocation3], 1
    %786 = vsyncpa [#allocation5], 1
    %787 = vsyncpa [#allocation8], 1

</llo_original>
